<compile_context>
chip_gen: v5e
topology: v5e:2x2
jax: 0.10.0
libtpu: 0.0.40
codegen_flags: <defaults>
</compile_context>

<pallas_src>
import jax
import jax.numpy as jnp
from jax.experimental import pallas as pl
from jax.experimental.pallas import tpu as pltpu


def _round_up(v, m):
    return (v + m - 1) // m * m


def _axis_iota(ndim, axis, n):
    shape = [1] * ndim
    shape[axis] = n
    return jax.lax.broadcasted_iota(jnp.int32, tuple(shape), axis)


def _reflect_shifted(arr, p, axis, valid):
    """Shifted copies of `arr` along `axis` with reflect boundary handling.

    For every offset d in {+1,-1,...,+p,-p} returns an array whose entry at index i
    (along `axis`) equals arr[reflect(i + d)] for 0 <= i < valid (reflection about
    the [0, valid) window).  Entries at i >= valid (alignment padding) are junk and
    must be cropped by the caller.  A roll cache is shared across offsets, so at
    most 2*p pltpu.roll ops are issued; border fixes are narrow iota selects.
    """
    n = arr.shape[axis]
    idx = _axis_iota(arr.ndim, axis, n)
    cache = {0: arr}

    def rolled(s):
        if s not in cache:
            cache[s] = pltpu.roll(arr, s % n, axis=axis)
        return cache[s]

    out = []
    for d in range(1, p + 1):
        vp = rolled(-d)                                  # interior: arr[i + d]
        for k in range(d):                               # high-edge reflect: i = valid-1-k
            vp = jnp.where(idx == valid - 1 - k, rolled(d - 2 * k), vp)
        vm = rolled(d)                                   # interior: arr[i - d]
        for k in range(d):                               # low-edge reflect: i = k
            vm = jnp.where(idx == k, rolled(2 * k - d), vm)
        out.append(vp)
        out.append(vm)
    return out


def _lane_reflect_sums(arr, p, valid):
    """Box sums of arr and arr**2 along the last axis, reflect boundary at `valid`.

    Rolls are shared between the two accumulators (square after the shift)."""
    s1 = arr
    s2 = arr * arr
    for v in _reflect_shifted(arr, p, axis=arr.ndim - 1, valid=valid):
        s1 = s1 + v
        s2 = s2 + v * v
    return s1, s2


def _sublane_plain_sum(arr, p):
    """Box sum along axis 0 with NO boundary handling (halo rows already present).

    Roll wrap-around only touches rows within p (< 8) of the array ends, which lie
    inside the 8-row halo strips and never reach the cropped output."""
    n = arr.shape[0]
    out = arr
    for d in range(1, p + 1):
        out = out + pltpu.roll(arr, (n - d) % n, axis=0) + pltpu.roll(arr, d, axis=0)
    return out


def _sublane_reflect_sum(arr, p, valid):
    """Box sum along axis 0 with reflect boundary at [0, valid) (whole-image path)."""
    out = arr
    for v in _reflect_shifted(arr, p, axis=0, valid=valid):
        out = out + v
    return out


def _pad_lanes(arr, new_w):
    w = arr.shape[-1]
    if new_w == w:
        return arr
    pad = jnp.zeros(arr.shape[:-1] + (new_w - w,), arr.dtype)
    return jnp.concatenate([arr, pad], axis=-1)          # data stays at lane offset 0


def _pad_rows(arr, new_r):
    r = arr.shape[0]
    if new_r == r:
        return arr
    pad = jnp.zeros((new_r - r,) + arr.shape[1:], arr.dtype)
    return jnp.concatenate([arr, pad], axis=0)           # data stays at row offset 0


def _make_tiled_kernel(ks, TH, W):
    """(1, TH, W) body tile + two (1, 8, W) neighbour strips supplying the H halo."""
    p = ks // 2
    Wp = _round_up(W, 128)
    inv = 1.0 / float(ks * ks)

    def kernel(x_ref, above_ref, below_ref, o_ref):
        i = pl.program_id(1)
        last = pl.num_programs(1) - 1
        is_top = i == 0
        is_bot = i == last

        x = x_ref[0].astype(jnp.float32)                 # (TH, W) body rows
        a = above_ref[0].astype(jnp.float32)             # (8, W) rows just above
        b = below_ref[0].astype(jnp.float32)             # (8, W) rows just below

        # At true image edges the halo strip is a clamped duplicate; overwrite the
        # p rows that are actually read with the mirrored body rows (tiny selects).
        row8 = _axis_iota(2, 0, 8)                       # (8, 1) sublane iota
        for e in range(1, p + 1):
            top_row = jnp.broadcast_to(x[e:e + 1, :], (8, W))
            bot_row = jnp.broadcast_to(x[TH - 1 - e:TH - e, :], (8, W))
            a = jnp.where(jnp.logical_and(is_top, row8 == 8 - e), top_row, a)
            b = jnp.where(jnp.logical_and(is_bot, row8 == e - 1), bot_row, b)

        # 8-aligned row concat (aligned bulk copies only); right-only zero pad keeps
        # rolls on a 128-multiple lane count when W itself is not a multiple of 128.
        ext = jnp.concatenate([a, x, b], axis=0)         # (TH + 16, W)
        ext = _pad_lanes(ext, Wp)

        s1, s2 = _lane_reflect_sums(ext, p, W)           # reflect at the true W border
        c1 = _sublane_plain_sum(s1, p)                   # halo rows already in place
        c2 = _sublane_plain_sum(s2, p)

        m = c1[8:8 + TH, :W] * inv                       # 8-aligned, offset-0 crops
        o_ref[0] = c2[8:8 + TH, :W] * inv - m * m

    return kernel


def _make_full_kernel(ks, H, W):
    """One whole (H, W) image per grid step (fallback for H % 8 != 0 or p > 7)."""
    p = ks // 2
    Hp = _round_up(H, 8)
    Wp = _round_up(W, 128)
    inv = 1.0 / float(ks * ks)

    def kernel(x_ref, o_ref):
        x = x_ref[0].astype(jnp.float32)                 # (H, W), cast in-kernel
        x = _pad_rows(x, Hp)                             # bottom/right zero pad only
        x = _pad_lanes(x, Wp)                            #   (data stays at offset 0)
        s1, s2 = _lane_reflect_sums(x, p, W)
        c1 = _sublane_reflect_sum(s1, p, H)
        c2 = _sublane_reflect_sum(s2, p, H)
        m = c1[:H, :W] * inv
        o_ref[0] = c2[:H, :W] * inv - m * m

    return kernel


def _pick_row_tile(H, W, p, target_bytes=2 << 20, max_rows=1024):
    """Largest multiple-of-8 divisor of H whose f32 working tile stays ~<= target."""
    if H % 8 != 0 or p > 7:
        return None
    bytes_per_row = 4 * _round_up(max(W, 1), 128)
    cap = (target_bytes // bytes_per_row) // 8 * 8
    cap = max(8, min(cap, max_rows, H))
    best = 8
    for t in range(8, cap + 1, 8):
        if H % t == 0:
            best = t
    return best


def uncertainty_measure(x, kernel_size: int = 3, row_block=None):
    """x: (N, 1, H, W) array -> (N, 1, H, W) float32 local variance."""
    ks = int(kernel_size)
    if ks < 1 or ks % 2 != 1:
        raise ValueError("kernel_size must be a positive odd integer")
    N, C, H, W = x.shape
    if C != 1:
        raise ValueError("UncertaintyMeasure's (1,1,ks,ks) conv requires C == 1")
    p = ks // 2

    if ks == 1:
        # Single-pixel window: E[x^2] - E[x]^2 == 0 exactly.
        return jnp.zeros((N, C, H, W), jnp.float32)
    if H < ks or W < ks:
        raise ValueError("this kernel requires H >= kernel_size and W >= kernel_size")

    xs = x.reshape(N, H, W)                              # original dtype stays in HBM

    out_sds = jax.ShapeDtypeStruct((N, H, W), jnp.float32)
    cost = pl.CostEstimate(
        flops=2 * ks * ks * N * H * W,
        transcendentals=0,
        bytes_accessed=int(xs.size) * xs.dtype.itemsize + N * H * W * 4,
    )

    if row_block is not None:
        ok = (row_block % 8 == 0) and (H % row_block == 0) and (p <= 7)
        TH = row_block if ok else None
    else:
        TH = _pick_row_tile(H, W, p)

    if TH is not None:
        n_tiles = H // TH
        thb = TH // 8                                    # row-tile size in 8-row strips
        hb_last = H // 8 - 1                             # last 8-row strip index
        tile_bytes = 4 * (TH + 16) * _round_up(W, 128)
        vmem_limit = int(min(100 << 20, max(32 << 20, 16 * tile_bytes)))

        out = pl.pallas_call(
            _make_tiled_kernel(ks, TH, W),
            out_shape=out_sds,
            grid_spec=pltpu.PrefetchScalarGridSpec(
                num_scalar_prefetch=0,
                grid=(N, n_tiles),
                in_specs=[
                    # body row tile
                    pl.BlockSpec((1, TH, W), lambda n, i: (n, i, 0)),
                    # 8-row strip just above the tile (clamped at the top edge)
                    pl.BlockSpec((1, 8, W),
                                 lambda n, i: (n, jnp.maximum(i * thb - 1, 0), 0)),
                    # 8-row strip just below the tile (clamped at the bottom edge)
                    pl.BlockSpec((1, 8, W),
                                 lambda n, i: (n, jnp.minimum((i + 1) * thb, hb_last), 0)),
                ],
                out_specs=pl.BlockSpec((1, TH, W), lambda n, i: (n, i, 0)),
            ),
            compiler_params=pltpu.CompilerParams(
                dimension_semantics=("parallel", "parallel"),
                vmem_limit_bytes=vmem_limit),
            cost_estimate=cost,
        )(xs, xs, xs)
    else:
        full_bytes = 4 * _round_up(H, 8) * _round_up(W, 128)
        vmem_limit = int(min(100 << 20, max(32 << 20, 12 * full_bytes)))
        out = pl.pallas_call(
            _make_full_kernel(ks, H, W),
            out_shape=out_sds,
            grid_spec=pltpu.PrefetchScalarGridSpec(
                num_scalar_prefetch=0,
                grid=(N,),
                in_specs=[pl.BlockSpec((1, H, W), lambda n: (n, 0, 0))],
                out_specs=pl.BlockSpec((1, H, W), lambda n: (n, 0, 0)),
            ),
            compiler_params=pltpu.CompilerParams(
                dimension_semantics=("parallel",),
                vmem_limit_bytes=vmem_limit),
            cost_estimate=cost,
        )(xs)

    return out.reshape(N, 1, H, W)


def _reference(x, kernel_size: int = 3):
    """Pure-JAX reference mirroring the PyTorch forward."""
    ks = kernel_size
    p = ks // 2
    xf = x.astype(jnp.float32)
    xpad = jnp.pad(xf, ((0, 0), (0, 0), (p, p), (p, p)), mode="reflect")
    k = jnp.ones((1, 1, ks, ks), jnp.float32) / float(ks * ks)
    conv = lambda a: jax.lax.conv_general_dilated(
        a, k, window_strides=(1, 1), padding="VALID",
        dimension_numbers=("NCHW", "OIHW", "NCHW"))
    return conv(xpad ** 2) - conv(xpad) ** 2


if __name__ == "__main__":
    key = jax.random.PRNGKey(0)
    k1, k2, k3, k4 = jax.random.split(key, 4)
    checks = []

    # (a) tiled path: grid (2, 4), W=256 (128-multiple -> no lane pad), halo strips.
    xa = jax.random.normal(k1, (2, 1, 32, 256), dtype=jnp.float32)
    checks.append((uncertainty_measure(xa, kernel_size=3, row_block=8), _reference(xa, 3)))

    # (b) auto tiling (single row tile, both edge mirrors in one block).
    checks.append((uncertainty_measure(xa, kernel_size=3), _reference(xa, 3)))

    # (c) bf16 input, odd spatial dims -> whole-image fallback, f32 cast in-kernel.
    xc = jax.random.normal(k2, (1, 1, 13, 40), dtype=jnp.bfloat16)
    checks.append((uncertainty_measure(xc, kernel_size=3), _reference(xc, 3)))

    # (d) kernel_size=5 (p=2), tiled path with 2-row mirrored / halo borders.
    xd = jax.random.normal(k3, (2, 1, 16, 128), dtype=jnp.float32)
    checks.append((uncertainty_measure(xd, kernel_size=5, row_block=8), _reference(xd, 5)))

    # (e) tiled path with W not a multiple of 128 (right-only lane pad in kernel).
    xe = jax.random.normal(k4, (1, 1, 24, 144), dtype=jnp.float32)
    checks.append((uncertainty_measure(xe, kernel_size=3, row_block=8), _reference(xe, 3)))

    for got, ref in checks:
        got = jax.block_until_ready(got)
        assert got.shape == ref.shape and got.dtype == jnp.float32
        err = float(jnp.max(jnp.abs(got - ref)))
        assert jnp.allclose(got, ref, atol=2e-5, rtol=1e-4), err

    print("KERNEL_OK")
</pallas_src>

<mosaic_0001>
module attributes {stable_mosaic.version = 11 : i64} {
  func.func @kernel(%arg0: i32, %arg1: i32, %arg2: memref<1x8x256xf32, #tpu.memory_space<vmem>>, %arg3: memref<1x8x256xf32, #tpu.memory_space<vmem>>, %arg4: memref<1x8x256xf32, #tpu.memory_space<vmem>>, %arg5: memref<1x8x256xf32, #tpu.memory_space<vmem>>) attributes {dimension_semantics = [#tpu.dimension_semantics<parallel>, #tpu.dimension_semantics<parallel>], iteration_bounds = array<i64: 2, 4>, scalar_prefetch = 0 : i64, scratch_operands = 0 : i64, tpu.core_type = #tpu.core_type<tc>, window_params = [{transform_indices = @transform_0, window_bounds = array<i64: 1, 8, 256>}, {transform_indices = @transform_1, window_bounds = array<i64: 1, 8, 256>}, {transform_indices = @transform_2, window_bounds = array<i64: 1, 8, 256>}, {transform_indices = @transform_3, window_bounds = array<i64: 1, 8, 256>}]} {
    %c0_i32 = arith.constant 0 : i32
    %0 = arith.cmpi eq, %arg1, %c0_i32 : i32
    %c3_i32 = arith.constant 3 : i32
    %1 = arith.cmpi eq, %arg1, %c3_i32 : i32
    %c0 = arith.constant 0 : index
    %c0_0 = arith.constant 0 : index
    %c0_1 = arith.constant 0 : index
    %2 = vector.load %arg2[%c0, %c0_0, %c0_1] : memref<1x8x256xf32, #tpu.memory_space<vmem>>, vector<1x8x256xf32>
    %3 = vector.shape_cast %2 : vector<1x8x256xf32> to vector<8x256xf32>
    %c0_2 = arith.constant 0 : index
    %c0_3 = arith.constant 0 : index
    %c0_4 = arith.constant 0 : index
    %4 = vector.load %arg3[%c0_2, %c0_3, %c0_4] : memref<1x8x256xf32, #tpu.memory_space<vmem>>, vector<1x8x256xf32>
    %5 = vector.shape_cast %4 : vector<1x8x256xf32> to vector<8x256xf32>
    %c0_5 = arith.constant 0 : index
    %c0_6 = arith.constant 0 : index
    %c0_7 = arith.constant 0 : index
    %6 = vector.load %arg4[%c0_5, %c0_6, %c0_7] : memref<1x8x256xf32, #tpu.memory_space<vmem>>, vector<1x8x256xf32>
    %7 = vector.shape_cast %6 : vector<1x8x256xf32> to vector<8x256xf32>
    %8 = tpu.iota {dimensions = array<i32: 0>} : vector<8x1xi32>
    %9 = vector.extract_strided_slice %3 {offsets = [1, 0], sizes = [1, 256], strides = [1, 1]} : vector<8x256xf32> to vector<1x256xf32>
    %10 = vector.shape_cast %9 : vector<1x256xf32> to vector<1x256xf32>
    %11 = vector.broadcast %10 : vector<1x256xf32> to vector<8x256xf32>
    %12 = vector.extract_strided_slice %3 {offsets = [6, 0], sizes = [1, 256], strides = [1, 1]} : vector<8x256xf32> to vector<1x256xf32>
    %13 = vector.shape_cast %12 : vector<1x256xf32> to vector<1x256xf32>
    %14 = vector.broadcast %13 : vector<1x256xf32> to vector<8x256xf32>
    %c7_i32 = arith.constant 7 : i32
    %15 = vector.broadcast %c7_i32 : i32 to vector<8x1xi32>
    %16 = arith.cmpi eq, %8, %15 : vector<8x1xi32>
    %17 = vector.broadcast %0 : i1 to vector<8x1xi1>
    %18 = arith.andi %17, %16 : vector<8x1xi1>
    %19 = vector.shape_cast %18 : vector<8x1xi1> to vector<8x1xi1>
    %20 = vector.broadcast %19 : vector<8x1xi1> to vector<8x256xi1>
    %21 = arith.select %20, %11, %5 : vector<8x256xi1>, vector<8x256xf32>
    %c0_i32_8 = arith.constant 0 : i32
    %22 = vector.broadcast %c0_i32_8 : i32 to vector<8x1xi32>
    %23 = arith.cmpi eq, %8, %22 : vector<8x1xi32>
    %24 = vector.broadcast %1 : i1 to vector<8x1xi1>
    %25 = arith.andi %24, %23 : vector<8x1xi1>
    %26 = vector.shape_cast %25 : vector<8x1xi1> to vector<8x1xi1>
    %27 = vector.broadcast %26 : vector<8x1xi1> to vector<8x256xi1>
    %28 = arith.select %27, %14, %7 : vector<8x256xi1>, vector<8x256xf32>
    %29 = tpu.concatenate %21, %3, %28 in 0 : vector<8x256xf32>, vector<8x256xf32>, vector<8x256xf32> -> vector<24x256xf32>
    %30 = arith.mulf %29, %29 : vector<24x256xf32>
    %31 = tpu.iota {dimensions = array<i32: 1>} : vector<1x256xi32>
    %c255_i32 = arith.constant 255 : i32
    %32 = tpu.dynamic_rotate %29 by %c255_i32 dim 1 : vector<24x256xf32>, i32 -> vector<24x256xf32>
    %c255_i32_9 = arith.constant 255 : i32
    %33 = vector.broadcast %c255_i32_9 : i32 to vector<1x256xi32>
    %34 = arith.cmpi eq, %31, %33 : vector<1x256xi32>
    %c1_i32 = arith.constant 1 : i32
    %35 = tpu.dynamic_rotate %29 by %c1_i32 dim 1 : vector<24x256xf32>, i32 -> vector<24x256xf32>
    %36 = vector.shape_cast %34 : vector<1x256xi1> to vector<1x256xi1>
    %37 = vector.broadcast %36 : vector<1x256xi1> to vector<24x256xi1>
    %38 = arith.select %37, %35, %32 : vector<24x256xi1>, vector<24x256xf32>
    %c0_i32_10 = arith.constant 0 : i32
    %39 = vector.broadcast %c0_i32_10 : i32 to vector<1x256xi32>
    %40 = arith.cmpi eq, %31, %39 : vector<1x256xi32>
    %41 = vector.shape_cast %40 : vector<1x256xi1> to vector<1x256xi1>
    %42 = vector.broadcast %41 : vector<1x256xi1> to vector<24x256xi1>
    %43 = arith.select %42, %32, %35 : vector<24x256xi1>, vector<24x256xf32>
    %44 = arith.addf %29, %38 : vector<24x256xf32>
    %45 = arith.mulf %38, %38 : vector<24x256xf32>
    %46 = arith.addf %30, %45 : vector<24x256xf32>
    %47 = arith.addf %44, %43 : vector<24x256xf32>
    %48 = arith.mulf %43, %43 : vector<24x256xf32>
    %49 = arith.addf %46, %48 : vector<24x256xf32>
    %c23_i32 = arith.constant 23 : i32
    %50 = tpu.dynamic_rotate %47 by %c23_i32 dim 0 : vector<24x256xf32>, i32 -> vector<24x256xf32>
    %51 = arith.addf %47, %50 : vector<24x256xf32>
    %c1_i32_11 = arith.constant 1 : i32
    %52 = tpu.dynamic_rotate %47 by %c1_i32_11 dim 0 : vector<24x256xf32>, i32 -> vector<24x256xf32>
    %53 = arith.addf %51, %52 : vector<24x256xf32>
    %c23_i32_12 = arith.constant 23 : i32
    %54 = tpu.dynamic_rotate %49 by %c23_i32_12 dim 0 : vector<24x256xf32>, i32 -> vector<24x256xf32>
    %55 = arith.addf %49, %54 : vector<24x256xf32>
    %c1_i32_13 = arith.constant 1 : i32
    %56 = tpu.dynamic_rotate %49 by %c1_i32_13 dim 0 : vector<24x256xf32>, i32 -> vector<24x256xf32>
    %57 = arith.addf %55, %56 : vector<24x256xf32>
    %58 = vector.extract_strided_slice %53 {offsets = [8, 0], sizes = [8, 256], strides = [1, 1]} : vector<24x256xf32> to vector<8x256xf32>
    %cst = arith.constant 0.111111112 : f32
    %59 = vector.broadcast %cst : f32 to vector<8x256xf32>
    %60 = arith.mulf %58, %59 : vector<8x256xf32>
    %61 = vector.extract_strided_slice %57 {offsets = [8, 0], sizes = [8, 256], strides = [1, 1]} : vector<24x256xf32> to vector<8x256xf32>
    %cst_14 = arith.constant 0.111111112 : f32
    %62 = vector.broadcast %cst_14 : f32 to vector<8x256xf32>
    %63 = arith.mulf %61, %62 : vector<8x256xf32>
    %64 = arith.mulf %60, %60 : vector<8x256xf32>
    %65 = arith.subf %63, %64 : vector<8x256xf32>
    %c0_15 = arith.constant 0 : index
    %c0_16 = arith.constant 0 : index
    %c0_17 = arith.constant 0 : index
    %66 = vector.load %arg5[%c0_15, %c0_16, %c0_17] : memref<1x8x256xf32, #tpu.memory_space<vmem>>, vector<1x8x256xf32>
    %67 = vector.shape_cast %66 : vector<1x8x256xf32> to vector<8x256xf32>
    %68 = vector.shape_cast %65 : vector<8x256xf32> to vector<1x8x256xf32>
    tpu.vector_store %arg5[%c0_15, %c0_16, %c0_17], %68 {strides = array<i32>} : memref<1x8x256xf32, #tpu.memory_space<vmem>>, vector<1x8x256xf32>,
    return
  }
  func.func @transform_0(%arg0: i32, %arg1: i32) -> (i32, i32, i32) {
    %c0_i32 = arith.constant 0 : i32
    %c0_i32_0 = arith.constant 0 : i32
    return %arg0, %arg1, %c0_i32 : i32, i32, i32
  }
  func.func @transform_1(%arg0: i32, %arg1: i32) -> (i32, i32, i32) {
    %c1_i32 = arith.constant 1 : i32
    %0 = arith.muli %arg1, %c1_i32 : i32
    %c1_i32_0 = arith.constant 1 : i32
    %1 = arith.subi %0, %c1_i32_0 : i32
    %c0_i32 = arith.constant 0 : i32
    %2 = arith.maxsi %1, %c0_i32 : i32
    %c0_i32_1 = arith.constant 0 : i32
    %c0_i32_2 = arith.constant 0 : i32
    return %arg0, %2, %c0_i32_1 : i32, i32, i32
  }
  func.func @transform_2(%arg0: i32, %arg1: i32) -> (i32, i32, i32) {
    %c1_i32 = arith.constant 1 : i32
    %0 = arith.addi %arg1, %c1_i32 : i32
    %c1_i32_0 = arith.constant 1 : i32
    %1 = arith.muli %0, %c1_i32_0 : i32
    %c3_i32 = arith.constant 3 : i32
    %2 = arith.minsi %1, %c3_i32 : i32
    %c0_i32 = arith.constant 0 : i32
    %c0_i32_1 = arith.constant 0 : i32
    return %arg0, %2, %c0_i32 : i32, i32, i32
  }
  func.func @transform_3(%arg0: i32, %arg1: i32) -> (i32, i32, i32) {
    %c0_i32 = arith.constant 0 : i32
    %c0_i32_0 = arith.constant 0 : i32
    return %arg0, %arg1, %c0_i32 : i32, i32, i32
  }
}

</mosaic_0001>

<llo_original>
// kernel: tpu_custom_call.1
$region0: #{tpu_custom_call.1}
  #allocation0 [shape = 'u32[]', space=smem, size = 0x4, offset = 0x4, fixed_abs, tag = 'smem constant byte address 0x4 - core index']
  #allocation1 [shape = 'u32[72,128]{1,0:T(1,128)}', space=vmem, size = 0x9000, scoped, tag = 'internal scratch']
  %s0 = inlined_call_operand.hbm [shape: f32[2,32,256], index: 0, kind: input, shape index: {}]
  %s1 = inlined_call_operand.hbm [shape: f32[2,32,256], index: 1, kind: input, shape index: {}]
  %s2 = inlined_call_operand.hbm [shape: f32[2,32,256], index: 2, kind: input, shape index: {}]
  %s3 = inlined_call_operand.hbm [shape: f32[2,32,256], index: 3, kind: output, shape index: {}]
  %s4 = sld [smem:[#allocation0]]
  $region57: #{tpu_custom_call.1} parent=0
    _
  %s6 = ssub.s32 1, %s4
  %s7 = scalar_select 0, %s6, %s4
  $region1: #{tpu_custom_call.1} parent=0
    #allocation2 [shape = 'u8[16384]{0}', space=vmem, size = 0x4000, scoped, tag = 'input window, operand 0']
    #allocation3 [shape = 's32[2]{0}', space=sflag, size = 0x8, scoped, tag = 'scoped memory for tpu_custom_call.1']
    #allocation4 [shape = 's32[2]{0}', space=sflag, size = 0x8, scoped, tag = 'scoped memory for tpu_custom_call.1']
    #allocation5 [shape = 'u8[16384]{0}', space=vmem, size = 0x4000, scoped, tag = 'input window, operand 1']
    #allocation6 [shape = 's32[2]{0}', space=sflag, size = 0x8, scoped, tag = 'scoped memory for tpu_custom_call.1']
    #allocation7 [shape = 'u8[16384]{0}', space=vmem, size = 0x4000, scoped, tag = 'input window, operand 2']
    #allocation8 [shape = 'u8[16384]{0}', space=vmem, size = 0x4000, scoped, tag = 'output window, operand 0']
    %8 = vsyncpa [#allocation3], 0
    %s9 = scalar_lea.sflag [#allocation3], 1
    %10 = vsyncpa %s9, 0
    %11 = vsyncpa [#allocation6], 0
    %s12 = scalar_lea.sflag [#allocation6], 1
    %13 = vsyncpa %s12, 0
    %14 = vsyncpa [#allocation4], 0
    %s15 = scalar_lea.sflag [#allocation4], 1
    %16 = vsyncpa %s15, 0
    loop: start=0, step=1, limit=10
    $region2: #{tpu_custom_call.1} parent=1 // loop_pre_header
      _
    $region3: #{tpu_custom_call.1} parent=1 // loop_header
      %s18 = sphi 0, %s22
      %p19 = scmp.ge.s32.totalorder %s18, 10
      %s25 = sphi 0, %s37
      %s26 = sphi 0, %s33
      %s27 = sphi 0, %s25
      %s28 = sphi 0, %s26
      %s29 = sphi 0, %s27
      %s30 = sphi 0, %s28
      %s42 = sphi 0, %s44
      %s45 = sphi 0, %s42
      %s46 = sphi 0, %s45
      %s62 = sphi 0, %s46
      %s76 = sphi 0, %s78
      %s79 = sphi 0, %s76
      %s80 = sphi 0, %s79
      %s96 = sphi 0, %s80
      %s110 = sphi 0, %s112
      %s113 = sphi 0, %s110
      %s114 = sphi 0, %s113
      %s130 = sphi 0, %s114
      %s138 = sphi 0, %s140
      %s141 = sphi 0, %s138
      %s142 = sphi 0, %s141
      %s158 = sphi 0, %s142
    $region4: #{tpu_custom_call.1} parent=1 // loop_header_branch
      %21 = sbr.rel (%p19) target = $region8
    $region5: #{tpu_custom_call.1} parent=1 // loop_body
      %s23 = ssub.s32 %s18, 1
      %s24 = ssub.s32 %s18, 2
      %s31 = sadd.s32 1, %s26
      %p32 = scmp.ge.s32.totalorder %s31, 4
      %s33 = scalar_select %p32, 0, %s31
      %s34 = sadd.s32 1, %s25
      %s35 = scalar_select %p32, %s34, %s25
      %p36 = scmp.ge.s32.totalorder %s35, 2
      %s37 = scalar_select %p36, 0, %s35
      %s38 = ssub.s32 %s25, %s37
      %s39 = ssub.s32 %s26, %s33
      %s40 = sor.u32 %s38, %s39
      %p41 = scmp.eq.s32.totalorder %s40, 0
      %s43 = sadd.s32 %s42, 1
      %s44 = scalar_select %p41, %s42, %s43
      %p47 = pneg %p41
      %p48 = scmp.eq.s32.totalorder %s18, 7
      %p49 = por %p47, %p48
      %p50 = scmp.ne.s32.totalorder %s42, %s45
      %p51 = scmp.eq.s32.totalorder %s18, 0
      %p52 = por %p50, %p51
      %p53 = scmp.ne.s32.totalorder %s42, %s45
      %p54 = scmp.eq.s32.totalorder %s23, 7
      %p55 = por %p53, %p54
      %p56 = scmp.ne.s32.totalorder %s45, %s46
      %p57 = scmp.eq.s32.totalorder %s23, 0
      %p58 = por %p56, %p57
      %p59 = scmp.ne.s32.totalorder %s45, %s46
      %p60 = scmp.eq.s32.totalorder %s24, 7
      %p61 = por %p59, %p60
      %p63 = scmp.ne.s32.totalorder %s46, %s62
      %p64 = scmp.eq.s32.totalorder %s24, 0
      %p65 = por %p63, %p64
      %s66 = ssub.s32 %s26, 1
      %p67 = scmp.gt.s32.totalorder %s66, 0
      %s68 = scalar_select %p67, %s66, 0
      %s69 = ssub.s32 %s33, 1
      %p70 = scmp.gt.s32.totalorder %s69, 0
      %s71 = scalar_select %p70, %s69, 0
      %s72 = ssub.s32 %s25, %s37
      %s73 = ssub.s32 %s68, %s71
      %s74 = sor.u32 %s72, %s73
      %p75 = scmp.eq.s32.totalorder %s74, 0
      %s77 = sadd.s32 %s76, 1
      %s78 = scalar_select %p75, %s76, %s77
      %p81 = pneg %p75
      %p82 = scmp.eq.s32.totalorder %s18, 7
      %p83 = por %p81, %p82
      %p84 = scmp.ne.s32.totalorder %s76, %s79
      %p85 = scmp.eq.s32.totalorder %s18, 0
      %p86 = por %p84, %p85
      %p87 = scmp.ne.s32.totalorder %s76, %s79
      %p88 = scmp.eq.s32.totalorder %s23, 7
      %p89 = por %p87, %p88
      %p90 = scmp.ne.s32.totalorder %s79, %s80
      %p91 = scmp.eq.s32.totalorder %s23, 0
      %p92 = por %p90, %p91
      %p93 = scmp.ne.s32.totalorder %s79, %s80
      %p94 = scmp.eq.s32.totalorder %s24, 7
      %p95 = por %p93, %p94
      %p97 = scmp.ne.s32.totalorder %s80, %s96
      %p98 = scmp.eq.s32.totalorder %s24, 0
      %p99 = por %p97, %p98
      %s100 = sadd.s32 %s26, 1
      %p101 = scmp.lt.s32.totalorder %s100, 3
      %s102 = scalar_select %p101, %s100, 3
      %s103 = sadd.s32 %s33, 1
      %p104 = scmp.lt.s32.totalorder %s103, 3
      %s105 = scalar_select %p104, %s103, 3
      %s106 = ssub.s32 %s25, %s37
      %s107 = ssub.s32 %s102, %s105
      %s108 = sor.u32 %s106, %s107
      %p109 = scmp.eq.s32.totalorder %s108, 0
      %s111 = sadd.s32 %s110, 1
      %s112 = scalar_select %p109, %s110, %s111
      %p115 = pneg %p109
      %p116 = scmp.eq.s32.totalorder %s18, 7
      %p117 = por %p115, %p116
      %p118 = scmp.ne.s32.totalorder %s110, %s113
      %p119 = scmp.eq.s32.totalorder %s18, 0
      %p120 = por %p118, %p119
      %p121 = scmp.ne.s32.totalorder %s110, %s113
      %p122 = scmp.eq.s32.totalorder %s23, 7
      %p123 = por %p121, %p122
      %p124 = scmp.ne.s32.totalorder %s113, %s114
      %p125 = scmp.eq.s32.totalorder %s23, 0
      %p126 = por %p124, %p125
      %p127 = scmp.ne.s32.totalorder %s113, %s114
      %p128 = scmp.eq.s32.totalorder %s24, 7
      %p129 = por %p127, %p128
      %p131 = scmp.ne.s32.totalorder %s114, %s130
      %p132 = scmp.eq.s32.totalorder %s24, 0
      %p133 = por %p131, %p132
      %s134 = ssub.s32 %s25, %s37
      %s135 = ssub.s32 %s26, %s33
      %s136 = sor.u32 %s134, %s135
      %p137 = scmp.eq.s32.totalorder %s136, 0
      %s139 = sadd.s32 %s138, 1
      %s140 = scalar_select %p137, %s138, %s139
      %p143 = pneg %p137
      %p144 = scmp.eq.s32.totalorder %s18, 7
      %p145 = por %p143, %p144
      %p146 = scmp.ne.s32.totalorder %s138, %s141
      %p147 = scmp.eq.s32.totalorder %s18, 0
      %p148 = por %p146, %p147
      %p149 = scmp.ne.s32.totalorder %s138, %s141
      %p150 = scmp.eq.s32.totalorder %s23, 7
      %p151 = por %p149, %p150
      %p152 = scmp.ne.s32.totalorder %s141, %s142
      %p153 = scmp.eq.s32.totalorder %s23, 0
      %p154 = por %p152, %p153
      %p155 = scmp.ne.s32.totalorder %s141, %s142
      %p156 = scmp.eq.s32.totalorder %s24, 7
      %p157 = por %p155, %p156
      %p159 = scmp.ne.s32.totalorder %s142, %s158
      %p160 = scmp.eq.s32.totalorder %s24, 0
      %p161 = por %p159, %p160
      %p162 = scmp.le.s32.totalorder 1, %s18
      %p163 = scmp.lt.s32.totalorder %s18, 9
      %p164 = pnand %p162, %p163
      %p165 = pneg %p164
      // Predicated region
      $region9: #{tpu_custom_call.1} parent=5 // pred_check
        _
      $region10: #{tpu_custom_call.1} parent=5 // pred_check_branch
        %167 = sbr.rel (%p164) target = $region12
      $region11: #{tpu_custom_call.1} parent=5 // pred_region
        %s168 = ssub.s32 %s18, 1
      $region12: #{tpu_custom_call.1} parent=5 // pred_fallthru
        _
      %p169 = scmp.lt.s32.totalorder %s18, 8
      // Predicated region
      $region13: #{tpu_custom_call.1} parent=5 // pred_check
        %p170 = pneg %p169
      $region14: #{tpu_custom_call.1} parent=5 // pred_check_branch
        %172 = sbr.rel (%p170) target = $region16
      $region15: #{tpu_custom_call.1} parent=5 // pred_region
        // Predicated region
        $region17: #{tpu_custom_call.1} parent=15 // pred_check
          %p173 = pneg %p52
        $region18: #{tpu_custom_call.1} parent=15 // pred_check_branch
          %175 = sbr.rel (%p173) target = $region20
        $region19: #{tpu_custom_call.1} parent=15 // pred_region
          %s176 = sand.u32 %s42, 1
          %s177 = scalar_lea.sflag [#allocation3], %s176
          %s178 = sand.u32 %s42, 1
          %s179 = smul.addr %s178, 16
          %s180 = scalar_lea.vmem [#allocation2], %s179
          %182 = vsyncadd %s177, 0
          %s183 = smul.addr %s26, 2
          %s184 = smul.addr %s25, 8
          %s185 = sadd.s32 %s183, %s184
          %s186 = smul.addr %s185, 8
          %s187 = scalar_lea.hbm %s0, %s186
          %s189 = sshll.u32 %s187, 4
          %s190 = int_to_ptr.hbm [resolvable:$true] %s189
          %s191 = sshll.u32 %s180, 4
          %s192 = int_to_ptr.vmem [resolvable:$true] %s191
          %194 = dma.hbm_to_vmem [thread:$0]  %s190, 256, %s192, %s177
        $region20: #{tpu_custom_call.1} parent=15 // pred_fallthru
          _
        // Predicated region
        $region21: #{tpu_custom_call.1} parent=15 // pred_check
          %p195 = pneg %p86
        $region22: #{tpu_custom_call.1} parent=15 // pred_check_branch
          %197 = sbr.rel (%p195) target = $region24
        $region23: #{tpu_custom_call.1} parent=15 // pred_region
          %s198 = sand.u32 %s18, 1
          %s199 = scalar_lea.sflag [#allocation6], %s198
          %s200 = sand.u32 %s76, 1
          %s201 = smul.addr %s200, 16
          %s202 = scalar_lea.vmem [#allocation5], %s201
          %s203 = ssub.s32 %s26, 1
          %p204 = scmp.gt.s32.totalorder %s203, 0
          %s205 = scalar_select %p204, %s203, 0
          %207 = vsyncadd %s199, 0
          %s208 = smul.addr %s205, 2
          %s209 = smul.addr %s25, 8
          %s210 = sadd.s32 %s208, %s209
          %s211 = smul.addr %s210, 8
          %s212 = scalar_lea.hbm %s1, %s211
          %s214 = sshll.u32 %s212, 4
          %s215 = int_to_ptr.hbm [resolvable:$true] %s214
          %s216 = sshll.u32 %s202, 4
          %s217 = int_to_ptr.vmem [resolvable:$true] %s216
          %219 = dma.hbm_to_vmem [thread:$0]  %s215, 256, %s217, %s199
        $region24: #{tpu_custom_call.1} parent=15 // pred_fallthru
          _
        // Predicated region
        $region25: #{tpu_custom_call.1} parent=15 // pred_check
          %p220 = pneg %p120
        $region26: #{tpu_custom_call.1} parent=15 // pred_check_branch
          %222 = sbr.rel (%p220) target = $region28
        $region27: #{tpu_custom_call.1} parent=15 // pred_region
          %s223 = sand.u32 %s18, 1
          %s224 = scalar_lea.sflag [#allocation6], %s223
          %s225 = sand.u32 %s110, 1
          %s226 = smul.addr %s225, 16
          %s227 = scalar_lea.vmem [#allocation7], %s226
          %s228 = sadd.s32 %s26, 1
          %p229 = scmp.lt.s32.totalorder %s228, 3
          %s230 = scalar_select %p229, %s228, 3
          %232 = vsyncadd %s224, 0
          %s233 = smul.addr %s230, 2
          %s234 = smul.addr %s25, 8
          %s235 = sadd.s32 %s233, %s234
          %s236 = smul.addr %s235, 8
          %s237 = scalar_lea.hbm %s2, %s236
          %s239 = sshll.u32 %s237, 4
          %s240 = int_to_ptr.hbm [resolvable:$true] %s239
          %s241 = sshll.u32 %s227, 4
          %s242 = int_to_ptr.vmem [resolvable:$true] %s241
          %244 = dma.hbm_to_vmem [thread:$0]  %s240, 256, %s242, %s224
        $region28: #{tpu_custom_call.1} parent=15 // pred_fallthru
          _
      $region16: #{tpu_custom_call.1} parent=5 // pred_fallthru
        _
      %p245 = scmp.le.s32.totalorder 1, %s18
      %p246 = scmp.lt.s32.totalorder %s18, 9
      %p247 = pnand %p245, %p246
      %p248 = pneg %p247
      // Predicated region
      $region29: #{tpu_custom_call.1} parent=5 // pred_check
        _
      $region30: #{tpu_custom_call.1} parent=5 // pred_check_branch
        %250 = sbr.rel (%p247) target = $region32
      $region31: #{tpu_custom_call.1} parent=5 // pred_region
        %s251 = ssub.s32 %s18, 1
        %s252 = sand.u32 %s45, 1
        %s253 = scalar_lea.sflag [#allocation3], %s252
        %s254 = sand.u32 %s45, 1
        %s255 = smul.addr %s254, 16
        %s256 = scalar_lea.vmem [#allocation2], %s255
        // Predicated region
        $region33: #{tpu_custom_call.1} parent=31 // pred_check
          %p257 = pneg %p58
        $region34: #{tpu_custom_call.1} parent=31 // pred_check_branch
          %259 = sbr.rel (%p257) target = $region36
        $region35: #{tpu_custom_call.1} parent=31 // pred_region
          %261 = dma.done %s253, 256
        $region36: #{tpu_custom_call.1} parent=31 // pred_fallthru
          _
        %s262 = sand.u32 %s23, 1
        %s263 = scalar_lea.sflag [#allocation6], %s262
        %s264 = sand.u32 %s79, 1
        %s265 = smul.addr %s264, 16
        %s266 = scalar_lea.vmem [#allocation5], %s265
        // Predicated region
        $region37: #{tpu_custom_call.1} parent=31 // pred_check
          %p267 = pneg %p92
        $region38: #{tpu_custom_call.1} parent=31 // pred_check_branch
          %269 = sbr.rel (%p267) target = $region40
        $region39: #{tpu_custom_call.1} parent=31 // pred_region
          %271 = dma.done %s263, 256
        $region40: #{tpu_custom_call.1} parent=31 // pred_fallthru
          _
        %s272 = sand.u32 %s23, 1
        %s273 = scalar_lea.sflag [#allocation6], %s272
        %s274 = sand.u32 %s113, 1
        %s275 = smul.addr %s274, 16
        %s276 = scalar_lea.vmem [#allocation7], %s275
        // Predicated region
        $region41: #{tpu_custom_call.1} parent=31 // pred_check
          %p277 = pneg %p126
        $region42: #{tpu_custom_call.1} parent=31 // pred_check_branch
          %279 = sbr.rel (%p277) target = $region44
        $region43: #{tpu_custom_call.1} parent=31 // pred_region
          %281 = dma.done %s273, 256
        $region44: #{tpu_custom_call.1} parent=31 // pred_fallthru
          _
        %s282 = sand.u32 %s45, 1
        %s283 = scalar_lea.sflag [#allocation3], %s282
        %s284 = sand.u32 %s45, 1
        %s285 = smul.addr %s284, 16
        %s286 = scalar_lea.vmem [#allocation2], %s285
        %p287 = pneg %p58
        %p288 = pneg %p55
        %s289 = sand.u32 %s23, 1
        %s290 = scalar_lea.sflag [#allocation6], %s289
        %s291 = sand.u32 %s79, 1
        %s292 = smul.addr %s291, 16
        %s293 = scalar_lea.vmem [#allocation5], %s292
        %p294 = pneg %p92
        %p295 = pneg %p89
        %s296 = sand.u32 %s23, 1
        %s297 = scalar_lea.sflag [#allocation6], %s296
        %s298 = sand.u32 %s113, 1
        %s299 = smul.addr %s298, 16
        %s300 = scalar_lea.vmem [#allocation7], %s299
        %p301 = pneg %p126
        %p302 = pneg %p123
        %p303 = pneg %p154
        %p304 = pneg %p151
        %s305 = sand.u32 %s141, 1
        %s306 = scalar_lea.sflag [#allocation4], %s305
        %s307 = sand.u32 %s141, 1
        %s308 = smul.addr %s307, 16
        %s309 = scalar_lea.vmem [#allocation8], %s308
        %s310 = ssub.s32 %s28, 1
        %p311 = scmp.gt.s32.totalorder %s310, 0
        %s312 = scalar_select %p311, %s310, 0
        %s313 = sadd.s32 %s28, 1
        %p314 = scmp.lt.s32.totalorder %s313, 3
        %s315 = scalar_select %p314, %s313, 3
        %p316 = scmp.eq.s32.totalorder %s28, 0
        %p317 = scmp.eq.s32.totalorder %s28, 3
        %v318 = vld [vmem:[%s256] sm:$0xff]
        %v319 = vld [vmem:[%s256 + $0x8] sm:$0xff]
        %v320 = vld [vmem:[%s266] sm:$0xff]
        %v321 = vld [vmem:[%s266 + $0x8] sm:$0xff]
        %v322 = vld [vmem:[%s276] sm:$0xff]
        %v323 = vld [vmem:[%s276 + $0x8] sm:$0xff]
        %v324 = vlaneseq
        %v325 = vshrl.u32 %v324, 7
        %v326 = vperm.slane %v318, 1
        %v327 = vperm.slane %v319, 1
        %v328 = vperm.slane %v318, 6
        %v329 = vperm.slane %v319, 6
        %vm330 = vcmp.eq.s32.totalorder %v325, 7
        %s331 = scalar_select %p316, 1, 0
        %v332 = vstv %s331
        %vm333 = vcmp.eq.s32.totalorder %v332, 1
        %vm334 = vmand %vm333, %vm330
        %v335 = vsel %vm334, 1, 0
        %vm336 = vcmp.eq.s32.totalorder %v335, 1
        %v337 = vsel %vm336, %v326, %v320
        %v338 = vsel %vm336, %v327, %v321
        %vm339 = vcmp.eq.s32.totalorder %v325, 0
        %s340 = scalar_select %p317, 1, 0
        %v341 = vstv %s340
        %vm342 = vcmp.eq.s32.totalorder %v341, 1
        %vm343 = vmand %vm342, %vm339
        %v344 = vsel %vm343, 1, 0
        %vm345 = vcmp.eq.s32.totalorder %v344, 1
        %v346 = vsel %vm345, %v328, %v322
        %v347 = vsel %vm345, %v329, %v323
        %v348 = vmul.f32 %v337, %v337
        %v349 = vmul.f32 %v338, %v338
        %v350 = vmul.f32 %v318, %v318
        %v351 = vmul.f32 %v319, %v319
        %v352 = vmul.f32 %v346, %v346
        %v353 = vmul.f32 %v347, %v347
        %v354 = vlaneseq
        %v355 = vand.u32 %v354, 127
        %v356 = vadd.s32 %v355, 128
        %357 = vrot.lane.b32.xlu0 %v337, 127
        %v358 = vpop.permute.xlu0 %357
        %359 = vrot.lane.b32.xlu0 %v318, 127
        %v360 = vpop.permute.xlu0 %359
        %361 = vrot.lane.b32.xlu0 %v346, 127
        %v362 = vpop.permute.xlu0 %361
        %363 = vrot.lane.b32.xlu0 %v338, 127
        %v364 = vpop.permute.xlu0 %363
        %365 = vrot.lane.b32.xlu0 %v319, 127
        %v366 = vpop.permute.xlu0 %365
        %367 = vrot.lane.b32.xlu0 %v347, 127
        %v368 = vpop.permute.xlu0 %367
        %vm369 = vcmp.lt.s32.totalorder %v355, 127
        %v370 = vsel %vm369, %v358, %v364
        %v371 = vsel %vm369, %v360, %v366
        %v372 = vsel %vm369, %v362, %v368
        %v373 = vsel %vm369, %v364, %v358
        %v374 = vsel %vm369, %v366, %v360
        %v375 = vsel %vm369, %v368, %v362
        %vm376 = vcmp.eq.s32.totalorder %v355, 255
        %vm377 = vcmp.eq.s32.totalorder %v356, 255
        %378 = vrot.lane.b32.xlu0 %v337, 1
        %v379 = vpop.permute.xlu0 %378
        %380 = vrot.lane.b32.xlu0 %v318, 1
        %v381 = vpop.permute.xlu0 %380
        %382 = vrot.lane.b32.xlu0 %v346, 1
        %v383 = vpop.permute.xlu0 %382
        %384 = vrot.lane.b32.xlu0 %v338, 1
        %v385 = vpop.permute.xlu0 %384
        %386 = vrot.lane.b32.xlu0 %v319, 1
        %v387 = vpop.permute.xlu0 %386
        %388 = vrot.lane.b32.xlu0 %v347, 1
        %v389 = vpop.permute.xlu0 %388
        %vm390 = vcmp.lt.s32.totalorder %v355, 1
        %v391 = vsel %vm390, %v379, %v385
        %v392 = vsel %vm390, %v381, %v387
        %v393 = vsel %vm390, %v383, %v389
        %v394 = vsel %vm390, %v385, %v379
        %v395 = vsel %vm390, %v387, %v381
        %v396 = vsel %vm390, %v389, %v383
        %v397 = vsel %vm376, 1, 0
        %v398 = vsel %vm377, 1, 0
        %vm399 = vcmp.eq.s32.totalorder %v397, 1
        %vm400 = vcmp.eq.s32.totalorder %v398, 1
        %v401 = vsel %vm399, %v394, %v370
        %v402 = vsel %vm400, %v391, %v373
        %v403 = vsel %vm399, %v395, %v371
        %v404 = vsel %vm400, %v392, %v374
        %v405 = vsel %vm399, %v396, %v372
        %v406 = vsel %vm400, %v393, %v375
        %vm407 = vcmp.eq.s32.totalorder %v355, 0
        %vm408 = vcmp.eq.s32.totalorder %v356, 0
        %v409 = vsel %vm407, 1, 0
        %v410 = vsel %vm408, 1, 0
        %vm411 = vcmp.eq.s32.totalorder %v409, 1
        %vm412 = vcmp.eq.s32.totalorder %v410, 1
        %v413 = vsel %vm411, %v370, %v394
        %v414 = vsel %vm412, %v373, %v391
        %v415 = vsel %vm411, %v371, %v395
        %v416 = vsel %vm412, %v374, %v392
        %v417 = vsel %vm411, %v372, %v396
        %v418 = vsel %vm412, %v375, %v393
        %v419 = vadd.f32 %v337, %v401
        %v420 = vadd.f32 %v338, %v402
        %v421 = vadd.f32 %v318, %v403
        %v422 = vadd.f32 %v319, %v404
        %v423 = vadd.f32 %v346, %v405
        %v424 = vadd.f32 %v347, %v406
        %v425 = vmul.f32 %v401, %v401
        %v426 = vmul.f32 %v402, %v402
        %v427 = vmul.f32 %v403, %v403
        %v428 = vmul.f32 %v404, %v404
        %v429 = vmul.f32 %v405, %v405
        %v430 = vmul.f32 %v406, %v406
        %v431 = vadd.f32 %v348, %v425
        %v432 = vadd.f32 %v349, %v426
        %v433 = vadd.f32 %v350, %v427
        %v434 = vadd.f32 %v351, %v428
        %v435 = vadd.f32 %v352, %v429
        %v436 = vadd.f32 %v353, %v430
        %v437 = vadd.f32 %v419, %v413
        %v438 = vadd.f32 %v420, %v414
        %v439 = vadd.f32 %v421, %v415
        %v440 = vadd.f32 %v422, %v416
        %v441 = vadd.f32 %v423, %v417
        %v442 = vadd.f32 %v424, %v418
        %v443 = vmul.f32 %v413, %v413
        %v444 = vmul.f32 %v414, %v414
        %v445 = vmul.f32 %v415, %v415
        %v446 = vmul.f32 %v416, %v416
        %v447 = vmul.f32 %v417, %v417
        %v448 = vmul.f32 %v418, %v418
        %v449 = vadd.f32 %v431, %v443
        %v450 = vadd.f32 %v432, %v444
        %v451 = vadd.f32 %v433, %v445
        %v452 = vadd.f32 %v434, %v446
        %v453 = vadd.f32 %v435, %v447
        %v454 = vadd.f32 %v436, %v448
        %v455 = vrot.slane %v439, 1
        %v456 = vrot.slane %v440, 1
        %v457 = vrot.slane %v441, 1
        %v458 = vrot.slane %v442, 1
        %vm459 = vcmp.lt.s32.totalorder %v325, 7
        %v460 = vsel %vm459, %v455, %v457
        %v461 = vsel %vm459, %v456, %v458
        %v462 = vadd.f32 %v439, %v460
        %v463 = vadd.f32 %v440, %v461
        %v464 = vrot.slane %v437, 7
        %v465 = vrot.slane %v438, 7
        %v466 = vrot.slane %v439, 7
        %v467 = vrot.slane %v440, 7
        %vm468 = vcmp.lt.s32.totalorder %v325, 1
        %v469 = vsel %vm468, %v464, %v466
        %v470 = vsel %vm468, %v465, %v467
        %v471 = vadd.f32 %v462, %v469
        %v472 = vadd.f32 %v463, %v470
        %v473 = vrot.slane %v451, 1
        %v474 = vrot.slane %v452, 1
        %v475 = vrot.slane %v453, 1
        %v476 = vrot.slane %v454, 1
        %v477 = vsel %vm459, %v473, %v475
        %v478 = vsel %vm459, %v474, %v476
        %v479 = vadd.f32 %v451, %v477
        %v480 = vadd.f32 %v452, %v478
        %v481 = vrot.slane %v449, 7
        %v482 = vrot.slane %v450, 7
        %v483 = vrot.slane %v451, 7
        %v484 = vrot.slane %v452, 7
        %v485 = vsel %vm468, %v481, %v483
        %v486 = vsel %vm468, %v482, %v484
        %v487 = vadd.f32 %v479, %v485
        %v488 = vadd.f32 %v480, %v486
        %v489 = vmul.f32 %v471, 0.11111111
        %v490 = vmul.f32 %v472, 0.11111111
        %v491 = vmul.f32 %v487, 0.11111111
        %v492 = vmul.f32 %v488, 0.11111111
        %v493 = vmul.f32 %v489, %v489
        %v494 = vmul.f32 %v490, %v490
        %v495 = vsub.f32 %v491, %v493
        %v496 = vsub.f32 %v492, %v494
        %497 = vst [vmem:[%s309] sm:$0xff] %v495
        %498 = vst [vmem:[%s309 + $0x8] sm:$0xff] %v496
        %s499 = sand.u32 %s141, 1
        %s500 = scalar_lea.sflag [#allocation4], %s499
        %s501 = sand.u32 %s141, 1
        %s502 = smul.addr %s501, 16
        %s503 = scalar_lea.vmem [#allocation8], %s502
        // Predicated region
        $region45: #{tpu_custom_call.1} parent=31 // pred_check
          %p504 = pneg %p151
        $region46: #{tpu_custom_call.1} parent=31 // pred_check_branch
          %506 = sbr.rel (%p504) target = $region48
        $region47: #{tpu_custom_call.1} parent=31 // pred_region
          %508 = vsyncadd %s500, 0
          %s509 = smul.addr %s28, 2
          %s510 = smul.addr %s27, 8
          %s511 = sadd.s32 %s509, %s510
          %s512 = smul.addr %s511, 8
          %s513 = scalar_lea.hbm %s3, %s512
          %s515 = sshll.u32 %s503, 4
          %s516 = int_to_ptr.vmem [resolvable:$true] %s515
          %s517 = sshll.u32 %s513, 4
          %s518 = int_to_ptr.hbm [resolvable:$true] %s517
          %520 = dma.vmem_to_hbm [thread:$0]  %s516, 256, %s518, %s500
        $region48: #{tpu_custom_call.1} parent=31 // pred_fallthru
          _
      $region32: #{tpu_custom_call.1} parent=5 // pred_fallthru
        _
      %p521 = scmp.le.s32.totalorder 2, %s18
      // Predicated region
      $region49: #{tpu_custom_call.1} parent=5 // pred_check
        %p522 = pneg %p521
      $region50: #{tpu_custom_call.1} parent=5 // pred_check_branch
        %524 = sbr.rel (%p522) target = $region52
      $region51: #{tpu_custom_call.1} parent=5 // pred_region
        %s525 = ssub.s32 %s18, 2
        // Predicated region
        $region53: #{tpu_custom_call.1} parent=51 // pred_check
          %p526 = pneg %p157
        $region54: #{tpu_custom_call.1} parent=51 // pred_check_branch
          %528 = sbr.rel (%p526) target = $region56
        $region55: #{tpu_custom_call.1} parent=51 // pred_region
          %s529 = sand.u32 %s142, 1
          %s530 = scalar_lea.sflag [#allocation4], %s529
          %s531 = sand.u32 %s142, 1
          %s532 = smul.addr %s531, 16
          %s533 = scalar_lea.vmem [#allocation8], %s532
          %535 = dma.done %s530, 256
        $region56: #{tpu_custom_call.1} parent=51 // pred_fallthru
          _
      $region52: #{tpu_custom_call.1} parent=5 // pred_fallthru
        _
    $region6: #{tpu_custom_call.1} parent=1 // loop_footer
      %s22 = sadd.s32 1, %s18
    $region7: #{tpu_custom_call.1} parent=1 // loop_footer_branch
      %17 = sbr.rel target = $region3
    $region8: #{tpu_custom_call.1} parent=1 // loop_exit
      _
    %536 = vsyncpa [#allocation3], 1
    %s537 = scalar_lea.sflag [#allocation3], 1
    %538 = vsyncpa %s537, 1
    %539 = vsyncpa [#allocation6], 1
    %s540 = scalar_lea.sflag [#allocation6], 1
    %541 = vsyncpa %s540, 1
    %542 = vsyncpa [#allocation4], 1
    %s543 = scalar_lea.sflag [#allocation4], 1
    %544 = vsyncpa %s543, 1

</llo_original>
